<compile_context>
chip_gen: v6e
topology: v6e:2x2x1
jax: 0.10.0
libtpu: 0.0.40
codegen_flags: <defaults>
</compile_context>

<pallas_src>
import functools

import jax
import jax.numpy as jnp
from jax.experimental import pallas as pl
from jax.experimental.pallas import tpu as pltpu


def _kl_sum_kernel(pred_ref, tgt_ref, out_ref, *,
                   n_pix, tile_pix, n_split, n_tiles_per_part, n_tiles_total):
    """One (C, tile_pix) slab: accumulate per-pixel -softmax(teacher) . log_softmax(student)."""
    g = pl.program_id(0)       # parallel unit (batch element x optional pixel-half)
    t_idx = pl.program_id(1)   # pixel tile within this parallel unit

    @pl.when(t_idx == 0)
    def _():
        out_ref[...] = jnp.zeros_like(out_ref)

    stu = pred_ref[0].astype(jnp.float32)   # (C, tile_pix) student logits
    tea = tgt_ref[0].astype(jnp.float32)    # (C, tile_pix) teacher logits

    # Teacher: unnormalized exp + normalizer (softmax folded into the row sum below).
    t_max = jnp.max(tea, axis=0, keepdims=True)                 # (1, tile_pix)
    t_exp = jnp.exp(tea - t_max)                                 # (C, tile_pix)
    t_z = jnp.sum(t_exp, axis=0, keepdims=True)                  # (1, tile_pix)

    # Student log-softmax pieces (numerically stable).
    p_max = jnp.max(stu, axis=0, keepdims=True)
    p_shift = stu - p_max
    p_logz = jnp.log(jnp.sum(jnp.exp(p_shift), axis=0, keepdims=True))

    # per_pixel = -sum_c softmax(tea) * log_softmax(stu)
    #           = p_logz - (sum_c t_exp * p_shift) / t_z      (since sum_c softmax == 1)
    # TODO(synk): pl.reciprocal(..., approx=True) is a further small win if the loss
    # tolerance allows; kept accurate here to preserve the 1e-5 reference check.
    dot = jnp.sum(t_exp * p_shift, axis=0, keepdims=True)        # (1, tile_pix)
    per_pix = (p_logz - dot * pl.reciprocal(t_z, approx=False)).reshape(1, 1, tile_pix)

    if n_split == 1:
        tile_global = t_idx
    else:
        tile_global = (g % n_split) * n_tiles_per_part + t_idx

    need_tail_mask = (n_pix % tile_pix) != 0
    may_overrun = (n_split * n_tiles_per_part) > n_tiles_total
    last_tile = n_tiles_total - 1

    if not need_tail_mask and not may_overrun:
        # Fast path: every tile is full and real.
        out_ref[...] += per_pix
    elif need_tail_mask:
        @pl.when(tile_global < last_tile)
        def _():
            out_ref[...] += per_pix

        @pl.when(tile_global == last_tile)   # overrun tiles (> last) fall through: skipped
        def _():
            pix = (jax.lax.broadcasted_iota(jnp.int32, (1, 1, tile_pix), 2)
                   + tile_global * tile_pix)
            # The OOB lanes of the partial DMA block may hold garbage/NaN; the select
            # below (not arithmetic) keeps the accumulated result exact.
            out_ref[...] += jnp.where(pix < n_pix, per_pix, 0.0)
    else:
        # Full tiles only, but the pixel split may contain padding tiles past the end.
        @pl.when(tile_global <= last_tile)
        def _():
            out_ref[...] += per_pix


def _vmem_budget_bytes():
    """Generation-aware VMEM budget for the pipelined working set."""
    try:
        cap = getattr(pltpu.get_tpu_info(), "vmem_capacity_bytes", None)
    except Exception:
        cap = None
    if not cap:
        return 12 * 1024 * 1024
    # ~24 MiB on 128-MiB-VMEM chips (v5e/v6e), ~16 MiB on v7x (64 MiB per TC).
    return int(min(24 * 1024 * 1024, max(8 * 1024 * 1024, cap // 4)))


def _choose_tile_pix(n_ch, n_pix, itemsize, budget_bytes):
    """Largest 128-multiple pixel tile whose pipelined footprint fits the budget."""
    c_pad = -(-n_ch // 8) * 8                 # sublane padding of the C axis
    temp_slabs = 4 if itemsize == 4 else 6    # in-kernel f32 temporaries (+ upcast copies)
    bytes_per_pixel = (2 * 2 * c_pad * itemsize   # two inputs, double buffered
                       + temp_slabs * c_pad * 4   # t_exp / p_shift / transients (f32)
                       + 6 * 8 * 4)               # (1, T) rows + accumulator buffers
    tile = (budget_bytes // bytes_per_pixel) // 128 * 128
    tile = max(tile, 128)
    return n_pix if tile >= n_pix else tile


def _kl_level_sum(pred_nchw, tgt_nchw, *, tile_pix=None):
    """Computes sum(-softmax(tgt) * log_softmax(pred)) / W / H for one NCHW level."""
    assert pred_nchw.shape == tgt_nchw.shape, \
        'the output dim of teacher and student differ'
    N, C, W, H = pred_nchw.shape
    P = W * H

    if P < 128:
        # Lane-sparse output + fixed launch overhead dominate: plain XLA is faster here.
        p2 = pred_nchw.reshape(N, C, P).astype(jnp.float32)
        t2 = tgt_nchw.reshape(N, C, P).astype(jnp.float32)
        return jnp.sum(-jax.nn.softmax(t2, axis=1) * jax.nn.log_softmax(p2, axis=1)) / W / H

    pred3 = pred_nchw.reshape(N, C, P)   # contiguous reshape: free, no transpose
    tgt3 = tgt_nchw.reshape(N, C, P)

    budget = _vmem_budget_bytes()
    if tile_pix is None:
        itemsize = max(pred3.dtype.itemsize, tgt3.dtype.itemsize)
        tile_pix = _choose_tile_pix(C, P, itemsize, budget)
    n_tiles_total = -(-P // tile_pix)

    # v7x megacore: guarantee >= 2 parallel work units when the batch axis can't.
    n_split = 2 if (N == 1 and n_tiles_total >= 2) else 1
    n_tiles_per_part = -(-n_tiles_total // n_split)
    n_par = N * n_split
    last_tile = n_tiles_total - 1

    def in_index_map(g, t):
        if n_split == 1:
            return (g, 0, t)
        # Clamp so padding tiles of the second half never DMA out of bounds;
        # their contribution is skipped inside the kernel.
        tile = jnp.minimum((g % n_split) * n_tiles_per_part + t, last_tile)
        return (g // n_split, 0, tile)

    kernel = functools.partial(
        _kl_sum_kernel, n_pix=P, tile_pix=tile_pix, n_split=n_split,
        n_tiles_per_part=n_tiles_per_part, n_tiles_total=n_tiles_total)

    partial_rows = pl.pallas_call(
        kernel,
        out_shape=jax.ShapeDtypeStruct((n_par, 1, tile_pix), jnp.float32),
        grid_spec=pltpu.PrefetchScalarGridSpec(
            num_scalar_prefetch=0,
            grid=(n_par, n_tiles_per_part),
            in_specs=[pl.BlockSpec((1, C, tile_pix), in_index_map),
                      pl.BlockSpec((1, C, tile_pix), in_index_map)],
            out_specs=pl.BlockSpec((1, 1, tile_pix), lambda g, t: (g, 0, 0)),
        ),
        compiler_params=pltpu.CompilerParams(
            # Parallel units (batch x optional pixel-half) can be sharded across
            # TensorCores; the pixel-tile reduction axis is sequential and last.
            dimension_semantics=("parallel", "arbitrary"),
            vmem_limit_bytes=budget + 8 * 1024 * 1024),
    )(pred3, tgt3)

    # Tiny final reduction (n_par * tile_pix elements) in plain JAX.
    return jnp.sum(partial_rows) / W / H


def ds_pixelwise_kl_loss(pred, soft_target, weight, aux_weight=0.4):
    """JAX/Pallas equivalent of DSPixelWiseKLLoss.forward. Inputs are dicts of NCHW arrays."""
    loss = _kl_level_sum(pred['level_0'], jax.lax.stop_gradient(soft_target['level_0']))
    if aux_weight > 0.0:
        loss_aux = _kl_level_sum(pred['level_2'],
                                 jax.lax.stop_gradient(soft_target['level_2']))
        loss = loss + aux_weight * loss_aux
    return weight * loss


def _reference_level(p, t):
    """Pure-JAX per-level reference mirroring the PyTorch code."""
    N, C, W, H = p.shape
    p2 = jnp.transpose(p, (0, 2, 3, 1)).reshape(-1, C).astype(jnp.float32)
    t2 = jnp.transpose(t, (0, 2, 3, 1)).reshape(-1, C).astype(jnp.float32)
    return jnp.sum(-jax.nn.softmax(t2, axis=1) * jax.nn.log_softmax(p2, axis=1)) / W / H


def _reference_loss(pred, soft_target, weight, aux_weight=0.4):
    loss = _reference_level(pred['level_0'], soft_target['level_0'])
    if aux_weight > 0.0:
        loss = loss + aux_weight * _reference_level(pred['level_2'], soft_target['level_2'])
    return weight * loss


if __name__ == "__main__":
    # Deterministic "parameters": the module only has scalar hyperparameters.
    loss_weight = 1.0
    aux_weight = 0.4

    key = jax.random.PRNGKey(0)
    k0, k1, k2, k3 = jax.random.split(key, 4)

    # level_0 at full resolution, level_2 downsampled (as in deep-supervision heads).
    pred = {
        'level_0': jax.random.normal(k0, (2, 4, 16, 16), dtype=jnp.float32),
        'level_2': jax.random.normal(k1, (2, 4, 4, 4), dtype=jnp.float32),
    }
    soft_target = {
        'level_0': jax.random.normal(k2, (2, 4, 16, 16), dtype=jnp.float32),
        'level_2': jax.random.normal(k3, (2, 4, 4, 4), dtype=jnp.float32),
    }

    loss = ds_pixelwise_kl_loss(pred, soft_target, loss_weight, aux_weight)
    loss = jax.block_until_ready(loss)

    ref = _reference_loss(pred, soft_target, loss_weight, aux_weight)
    assert jnp.allclose(loss, ref, rtol=1e-5, atol=1e-5), (loss, ref)

    # Extra correctness checks exercising the multi-tile, tail-mask, pixel-split and
    # overrun-guard code paths (small shapes, forced tile width so they stay cheap).
    tests = [
        ((1, 4, 20, 20), 128),   # N=1 -> 2-way pixel split, ragged last tile
        ((1, 4, 16, 24), 128),   # N=1 -> split with odd tile count (overrun guard only)
        ((2, 4, 20, 20), 128),   # N>=2, ragged last tile, no split
        ((2, 6, 16, 16), 128),   # channel count not a divisor of 8
    ]
    for ti, (shape, tp) in enumerate(tests):
        ka, kb = jax.random.split(jax.random.PRNGKey(100 + ti))
        a = jax.random.normal(ka, shape, dtype=jnp.float32)
        b = jax.random.normal(kb, shape, dtype=jnp.float32)
        got = jax.block_until_ready(_kl_level_sum(a, b, tile_pix=tp))
        want = _reference_level(a, b)
        assert jnp.allclose(got, want, rtol=1e-5, atol=1e-5), (shape, got, want)

    print("KERNEL_OK")
</pallas_src>

<mosaic_0001>
module attributes {stable_mosaic.version = 11 : i64} {
  func.func @_kl_sum_kernel(%arg0: i32, %arg1: i32, %arg2: memref<1x4x256xf32, #tpu.memory_space<vmem>>, %arg3: memref<1x4x256xf32, #tpu.memory_space<vmem>>, %arg4: memref<1x1x256xf32, #tpu.memory_space<vmem>>) attributes {dimension_semantics = [#tpu.dimension_semantics<parallel>, #tpu.dimension_semantics<arbitrary>], iteration_bounds = array<i64: 2, 1>, scalar_prefetch = 0 : i64, scratch_operands = 0 : i64, tpu.core_type = #tpu.core_type<tc>, window_params = [{transform_indices = @transform_0, window_bounds = array<i64: 1, 4, 256>}, {transform_indices = @transform_1, window_bounds = array<i64: 1, 4, 256>}, {transform_indices = @transform_2, window_bounds = array<i64: 1, 1, 256>}]} {
    %c0_i32 = arith.constant 0 : i32
    %0 = arith.cmpi eq, %arg1, %c0_i32 : i32
    %1 = arith.extui %0 : i1 to i32
    %c0_i32_0 = arith.constant 0 : i32
    %2 = arith.cmpi ne, %1, %c0_i32_0 : i32
    scf.if %2 {
      %cst_16 = arith.constant 0.000000e+00 : f32
      %32 = vector.broadcast %cst_16 : f32 to vector<1x1x256xf32>
      %c0_17 = arith.constant 0 : index
      %c0_18 = arith.constant 0 : index
      %c0_19 = arith.constant 0 : index
      %33 = vector.load %arg4[%c0_17, %c0_18, %c0_19] : memref<1x1x256xf32, #tpu.memory_space<vmem>>, vector<1x1x256xf32>
      tpu.vector_store %arg4[%c0_17, %c0_18, %c0_19], %32 {strides = array<i32>} : memref<1x1x256xf32, #tpu.memory_space<vmem>>, vector<1x1x256xf32>,
    } else {
    }
    %c0 = arith.constant 0 : index
    %c0_1 = arith.constant 0 : index
    %c0_2 = arith.constant 0 : index
    %3 = vector.load %arg2[%c0, %c0_1, %c0_2] : memref<1x4x256xf32, #tpu.memory_space<vmem>>, vector<1x4x256xf32>
    %4 = vector.shape_cast %3 : vector<1x4x256xf32> to vector<4x256xf32>
    %c0_3 = arith.constant 0 : index
    %c0_4 = arith.constant 0 : index
    %c0_5 = arith.constant 0 : index
    %5 = vector.load %arg3[%c0_3, %c0_4, %c0_5] : memref<1x4x256xf32, #tpu.memory_space<vmem>>, vector<1x4x256xf32>
    %6 = vector.shape_cast %5 : vector<1x4x256xf32> to vector<4x256xf32>
    %cst = arith.constant dense<0xFF800000> : vector<256xf32>
    %7 = vector.multi_reduction <maximumf>, %6, %cst [0] : vector<4x256xf32> to vector<256xf32>
    %8 = vector.shape_cast %7 : vector<256xf32> to vector<1x256xf32>
    %9 = vector.broadcast %8 : vector<1x256xf32> to vector<4x256xf32>
    %10 = arith.subf %6, %9 : vector<4x256xf32>
    %11 = math.exp %10 : vector<4x256xf32>
    %cst_6 = arith.constant dense<0.000000e+00> : vector<256xf32>
    %12 = vector.multi_reduction <add>, %11, %cst_6 [0] : vector<4x256xf32> to vector<256xf32>
    %13 = vector.shape_cast %12 : vector<256xf32> to vector<1x256xf32>
    %cst_7 = arith.constant dense<0xFF800000> : vector<256xf32>
    %14 = vector.multi_reduction <maximumf>, %4, %cst_7 [0] : vector<4x256xf32> to vector<256xf32>
    %15 = vector.shape_cast %14 : vector<256xf32> to vector<1x256xf32>
    %16 = vector.broadcast %15 : vector<1x256xf32> to vector<4x256xf32>
    %17 = arith.subf %4, %16 : vector<4x256xf32>
    %18 = math.exp %17 : vector<4x256xf32>
    %cst_8 = arith.constant dense<0.000000e+00> : vector<256xf32>
    %19 = vector.multi_reduction <add>, %18, %cst_8 [0] : vector<4x256xf32> to vector<256xf32>
    %20 = vector.shape_cast %19 : vector<256xf32> to vector<1x256xf32>
    %21 = math.log %20 : vector<1x256xf32>
    %22 = arith.mulf %11, %17 : vector<4x256xf32>
    %cst_9 = arith.constant dense<0.000000e+00> : vector<256xf32>
    %23 = vector.multi_reduction <add>, %22, %cst_9 [0] : vector<4x256xf32> to vector<256xf32>
    %24 = vector.shape_cast %23 : vector<256xf32> to vector<1x256xf32>
    %25 = tpu.reciprocal %13 : vector<1x256xf32> -> vector<1x256xf32>
    %26 = arith.mulf %24, %25 : vector<1x256xf32>
    %27 = arith.subf %21, %26 : vector<1x256xf32>
    %28 = vector.shape_cast %27 : vector<1x256xf32> to vector<1x1x256xf32>
    %c0_10 = arith.constant 0 : index
    %c0_11 = arith.constant 0 : index
    %c0_12 = arith.constant 0 : index
    %29 = vector.load %arg4[%c0_10, %c0_11, %c0_12] : memref<1x1x256xf32, #tpu.memory_space<vmem>>, vector<1x1x256xf32>
    %30 = arith.addf %29, %28 : vector<1x1x256xf32>
    %c0_13 = arith.constant 0 : index
    %c0_14 = arith.constant 0 : index
    %c0_15 = arith.constant 0 : index
    %31 = vector.load %arg4[%c0_13, %c0_14, %c0_15] : memref<1x1x256xf32, #tpu.memory_space<vmem>>, vector<1x1x256xf32>
    tpu.vector_store %arg4[%c0_13, %c0_14, %c0_15], %30 {strides = array<i32>} : memref<1x1x256xf32, #tpu.memory_space<vmem>>, vector<1x1x256xf32>,
    return
  }
  func.func @transform_0(%arg0: i32, %arg1: i32) -> (i32, i32, i32) {
    %c0_i32 = arith.constant 0 : i32
    %c0_i32_0 = arith.constant 0 : i32
    return %arg0, %c0_i32, %arg1 : i32, i32, i32
  }
  func.func @transform_1(%arg0: i32, %arg1: i32) -> (i32, i32, i32) {
    %c0_i32 = arith.constant 0 : i32
    %c0_i32_0 = arith.constant 0 : i32
    return %arg0, %c0_i32, %arg1 : i32, i32, i32
  }
  func.func @transform_2(%arg0: i32, %arg1: i32) -> (i32, i32, i32) {
    %c0_i32 = arith.constant 0 : i32
    %c0_i32_0 = arith.constant 0 : i32
    %c0_i32_1 = arith.constant 0 : i32
    return %arg0, %c0_i32, %c0_i32_0 : i32, i32, i32
  }
}

</mosaic_0001>

<llo_original>
// kernel: tpu_custom_call.1
$region0: #{tpu_custom_call.1}
  #allocation0 [shape = 'u32[]', space=smem, size = 0x4, offset = 0x4, fixed_abs, tag = 'smem constant byte address 0x4 - core index']
  #allocation1 [shape = 'u32[144,128]{1,0:T(1,128)}', space=vmem, size = 0x12000, scoped, tag = 'internal scratch']
  %s0 = inlined_call_operand.hbm [shape: f32[2,4,256], index: 0, kind: input, shape index: {}]
  %s1 = inlined_call_operand.hbm [shape: f32[2,4,256], index: 1, kind: input, shape index: {}]
  %s2 = inlined_call_operand.hbm [shape: f32[2,1,256], index: 2, kind: output, shape index: {}]
  %s3 = sld [smem:[#allocation0]]
  $region53: #{tpu_custom_call.1} parent=0
    _
  %s5 = ssub.s32 1, %s3
  %s6 = scalar_select 0, %s5, %s3
  $region1: #{tpu_custom_call.1} parent=0
    #allocation2 [shape = 'u8[8192]{0}', space=vmem, size = 0x2000, scoped, tag = 'input window, operand 0']
    #allocation3 [shape = 's32[2]{0}', space=sflag, size = 0x8, scoped, tag = 'scoped memory for tpu_custom_call.1']
    #allocation4 [shape = 's32[2]{0}', space=sflag, size = 0x8, scoped, tag = 'scoped memory for tpu_custom_call.1']
    #allocation5 [shape = 'u8[8192]{0}', space=vmem, size = 0x2000, scoped, tag = 'input window, operand 1']
    #allocation6 [shape = 's32[2]{0}', space=sflag, size = 0x8, scoped, tag = 'scoped memory for tpu_custom_call.1']
    #allocation7 [shape = 'u8[2048]{0}', space=vmem, size = 0x800, scoped, tag = 'output window, operand 0']
    %7 = vsyncpa [#allocation3], 0
    %s8 = scalar_lea.sflag [#allocation3], 1
    %9 = vsyncpa %s8, 0
    %10 = vsyncpa [#allocation6], 0
    %s11 = scalar_lea.sflag [#allocation6], 1
    %12 = vsyncpa %s11, 0
    %13 = vsyncpa [#allocation4], 0
    %s14 = scalar_lea.sflag [#allocation4], 1
    %15 = vsyncpa %s14, 0
    loop: start=0, step=1, limit=4
    $region2: #{tpu_custom_call.1} parent=1 // loop_pre_header
      _
    $region3: #{tpu_custom_call.1} parent=1 // loop_header
      %s17 = sphi 0, %s21
      %p18 = scmp.ge.s32.totalorder %s17, 4
      %s24 = sphi 0, %s36
      %s25 = sphi 0, %s32
      %s26 = sphi 0, %s24
      %s27 = sphi 0, %s25
      %s28 = sphi 0, %s26
      %s29 = sphi 0, %s27
      %s41 = sphi 0, %s43
      %s44 = sphi 0, %s41
      %s45 = sphi 0, %s44
      %s61 = sphi 0, %s45
      %s69 = sphi 0, %s71
      %s72 = sphi 0, %s69
      %s73 = sphi 0, %s72
      %s89 = sphi 0, %s73
      %s95 = sphi 0, %s97
      %s98 = sphi 0, %s95
      %s99 = sphi 0, %s98
      %s115 = sphi 0, %s99
    $region4: #{tpu_custom_call.1} parent=1 // loop_header_branch
      %20 = sbr.rel (%p18) target = $region8
    $region5: #{tpu_custom_call.1} parent=1 // loop_body
      %s22 = ssub.s32 %s17, 1
      %s23 = ssub.s32 %s17, 2
      %s30 = sadd.s32 1, %s25
      %p31 = scmp.ge.s32.totalorder %s30, 1
      %s32 = scalar_select %p31, 0, %s30
      %s33 = sadd.s32 1, %s24
      %s34 = scalar_select %p31, %s33, %s24
      %p35 = scmp.ge.s32.totalorder %s34, 2
      %s36 = scalar_select %p35, 0, %s34
      %s37 = ssub.s32 %s24, %s36
      %s38 = ssub.s32 %s25, %s32
      %s39 = sor.u32 %s37, %s38
      %p40 = scmp.eq.s32.totalorder %s39, 0
      %s42 = sadd.s32 %s41, 1
      %s43 = scalar_select %p40, %s41, %s42
      %p46 = pneg %p40
      %p47 = scmp.eq.s32.totalorder %s17, 1
      %p48 = por %p46, %p47
      %p49 = scmp.ne.s32.totalorder %s41, %s44
      %p50 = scmp.eq.s32.totalorder %s17, 0
      %p51 = por %p49, %p50
      %p52 = scmp.ne.s32.totalorder %s41, %s44
      %p53 = scmp.eq.s32.totalorder %s22, 1
      %p54 = por %p52, %p53
      %p55 = scmp.ne.s32.totalorder %s44, %s45
      %p56 = scmp.eq.s32.totalorder %s22, 0
      %p57 = por %p55, %p56
      %p58 = scmp.ne.s32.totalorder %s44, %s45
      %p59 = scmp.eq.s32.totalorder %s23, 1
      %p60 = por %p58, %p59
      %p62 = scmp.ne.s32.totalorder %s45, %s61
      %p63 = scmp.eq.s32.totalorder %s23, 0
      %p64 = por %p62, %p63
      %s65 = ssub.s32 %s24, %s36
      %s66 = ssub.s32 %s25, %s32
      %s67 = sor.u32 %s65, %s66
      %p68 = scmp.eq.s32.totalorder %s67, 0
      %s70 = sadd.s32 %s69, 1
      %s71 = scalar_select %p68, %s69, %s70
      %p74 = pneg %p68
      %p75 = scmp.eq.s32.totalorder %s17, 1
      %p76 = por %p74, %p75
      %p77 = scmp.ne.s32.totalorder %s69, %s72
      %p78 = scmp.eq.s32.totalorder %s17, 0
      %p79 = por %p77, %p78
      %p80 = scmp.ne.s32.totalorder %s69, %s72
      %p81 = scmp.eq.s32.totalorder %s22, 1
      %p82 = por %p80, %p81
      %p83 = scmp.ne.s32.totalorder %s72, %s73
      %p84 = scmp.eq.s32.totalorder %s22, 0
      %p85 = por %p83, %p84
      %p86 = scmp.ne.s32.totalorder %s72, %s73
      %p87 = scmp.eq.s32.totalorder %s23, 1
      %p88 = por %p86, %p87
      %p90 = scmp.ne.s32.totalorder %s73, %s89
      %p91 = scmp.eq.s32.totalorder %s23, 0
      %p92 = por %p90, %p91
      %s93 = ssub.s32 %s24, %s36
      %p94 = scmp.eq.s32.totalorder %s93, 0
      %s96 = sadd.s32 %s95, 1
      %s97 = scalar_select %p94, %s95, %s96
      %p100 = pneg %p94
      %p101 = scmp.eq.s32.totalorder %s17, 1
      %p102 = por %p100, %p101
      %p103 = scmp.ne.s32.totalorder %s95, %s98
      %p104 = scmp.eq.s32.totalorder %s17, 0
      %p105 = por %p103, %p104
      %p106 = scmp.ne.s32.totalorder %s95, %s98
      %p107 = scmp.eq.s32.totalorder %s22, 1
      %p108 = por %p106, %p107
      %p109 = scmp.ne.s32.totalorder %s98, %s99
      %p110 = scmp.eq.s32.totalorder %s22, 0
      %p111 = por %p109, %p110
      %p112 = scmp.ne.s32.totalorder %s98, %s99
      %p113 = scmp.eq.s32.totalorder %s23, 1
      %p114 = por %p112, %p113
      %p116 = scmp.ne.s32.totalorder %s99, %s115
      %p117 = scmp.eq.s32.totalorder %s23, 0
      %p118 = por %p116, %p117
      %p119 = scmp.le.s32.totalorder 1, %s17
      %p120 = scmp.lt.s32.totalorder %s17, 3
      %p121 = pnand %p119, %p120
      %p122 = pneg %p121
      // Predicated region
      $region9: #{tpu_custom_call.1} parent=5 // pred_check
        _
      $region10: #{tpu_custom_call.1} parent=5 // pred_check_branch
        %124 = sbr.rel (%p121) target = $region12
      $region11: #{tpu_custom_call.1} parent=5 // pred_region
        %s125 = ssub.s32 %s17, 1
      $region12: #{tpu_custom_call.1} parent=5 // pred_fallthru
        _
      %p126 = scmp.lt.s32.totalorder %s17, 2
      // Predicated region
      $region13: #{tpu_custom_call.1} parent=5 // pred_check
        %p127 = pneg %p126
      $region14: #{tpu_custom_call.1} parent=5 // pred_check_branch
        %129 = sbr.rel (%p127) target = $region16
      $region15: #{tpu_custom_call.1} parent=5 // pred_region
        // Predicated region
        $region17: #{tpu_custom_call.1} parent=15 // pred_check
          %p130 = pneg %p51
        $region18: #{tpu_custom_call.1} parent=15 // pred_check_branch
          %132 = sbr.rel (%p130) target = $region20
        $region19: #{tpu_custom_call.1} parent=15 // pred_region
          %s133 = sand.u32 %s41, 1
          %s134 = scalar_lea.sflag [#allocation3], %s133
          %s135 = sand.u32 %s41, 1
          %s136 = smul.addr %s135, 8
          %s137 = scalar_lea.vmem [#allocation2], %s136
          %s138 = smul.u32 2, %s25
          %s140 = ssub.s32 128, 128
          %141 = vsyncadd %s134, %s140
          %s142 = smul.addr %s24, 2
          %s143 = sadd.s32 %s138, %s142
          %s144 = smul.addr %s143, 64
          %s145 = scalar_lea.hbm %s0, %s144
          %s147 = sshll.u32 %s137, 4
          %s148 = int_to_ptr.vmem [resolvable:$true] %s147
          %150 = dma.hbm_to_vmem [thread:$0]  %s145, 128, %s148, %s134
        $region20: #{tpu_custom_call.1} parent=15 // pred_fallthru
          _
        // Predicated region
        $region21: #{tpu_custom_call.1} parent=15 // pred_check
          %p151 = pneg %p79
        $region22: #{tpu_custom_call.1} parent=15 // pred_check_branch
          %153 = sbr.rel (%p151) target = $region24
        $region23: #{tpu_custom_call.1} parent=15 // pred_region
          %s154 = sand.u32 %s69, 1
          %s155 = scalar_lea.sflag [#allocation6], %s154
          %s156 = sand.u32 %s69, 1
          %s157 = smul.addr %s156, 8
          %s158 = scalar_lea.vmem [#allocation5], %s157
          %s159 = smul.u32 2, %s25
          %s161 = ssub.s32 128, 128
          %162 = vsyncadd %s155, %s161
          %s163 = smul.addr %s24, 2
          %s164 = sadd.s32 %s159, %s163
          %s165 = smul.addr %s164, 64
          %s166 = scalar_lea.hbm %s1, %s165
          %s168 = sshll.u32 %s158, 4
          %s169 = int_to_ptr.vmem [resolvable:$true] %s168
          %171 = dma.hbm_to_vmem [thread:$0]  %s166, 128, %s169, %s155
        $region24: #{tpu_custom_call.1} parent=15 // pred_fallthru
          _
      $region16: #{tpu_custom_call.1} parent=5 // pred_fallthru
        _
      %p172 = scmp.le.s32.totalorder 1, %s17
      %p173 = scmp.lt.s32.totalorder %s17, 3
      %p174 = pnand %p172, %p173
      %p175 = pneg %p174
      // Predicated region
      $region25: #{tpu_custom_call.1} parent=5 // pred_check
        _
      $region26: #{tpu_custom_call.1} parent=5 // pred_check_branch
        %177 = sbr.rel (%p174) target = $region28
      $region27: #{tpu_custom_call.1} parent=5 // pred_region
        %s178 = ssub.s32 %s17, 1
        %s179 = sand.u32 %s44, 1
        %s180 = scalar_lea.sflag [#allocation3], %s179
        %s181 = sand.u32 %s44, 1
        %s182 = smul.addr %s181, 8
        %s183 = scalar_lea.vmem [#allocation2], %s182
        // Predicated region
        $region29: #{tpu_custom_call.1} parent=27 // pred_check
          %p184 = pneg %p57
        $region30: #{tpu_custom_call.1} parent=27 // pred_check_branch
          %186 = sbr.rel (%p184) target = $region32
        $region31: #{tpu_custom_call.1} parent=27 // pred_region
          %187 = dma.done %s180, 128
        $region32: #{tpu_custom_call.1} parent=27 // pred_fallthru
          _
        %s188 = sand.u32 %s72, 1
        %s189 = scalar_lea.sflag [#allocation6], %s188
        %s190 = sand.u32 %s72, 1
        %s191 = smul.addr %s190, 8
        %s192 = scalar_lea.vmem [#allocation5], %s191
        // Predicated region
        $region33: #{tpu_custom_call.1} parent=27 // pred_check
          %p193 = pneg %p85
        $region34: #{tpu_custom_call.1} parent=27 // pred_check_branch
          %195 = sbr.rel (%p193) target = $region36
        $region35: #{tpu_custom_call.1} parent=27 // pred_region
          %196 = dma.done %s189, 128
        $region36: #{tpu_custom_call.1} parent=27 // pred_fallthru
          _
        %s197 = sand.u32 %s44, 1
        %s198 = scalar_lea.sflag [#allocation3], %s197
        %s199 = sand.u32 %s44, 1
        %s200 = smul.addr %s199, 8
        %s201 = scalar_lea.vmem [#allocation2], %s200
        %p202 = pneg %p57
        %p203 = pneg %p54
        %s204 = sand.u32 %s72, 1
        %s205 = scalar_lea.sflag [#allocation6], %s204
        %s206 = sand.u32 %s72, 1
        %s207 = smul.addr %s206, 8
        %s208 = scalar_lea.vmem [#allocation5], %s207
        %p209 = pneg %p85
        %p210 = pneg %p82
        %p211 = pneg %p111
        %p212 = pneg %p108
        %s213 = sand.u32 %s98, 1
        %s214 = scalar_lea.sflag [#allocation4], %s213
        %s215 = sand.u32 %s98, 1
        %s216 = smul.addr %s215, 2
        %s217 = scalar_lea.vmem [#allocation7], %s216
        %s218 = smul.u32 2, %s27
        %s219 = smul.u32 2, %s27
        %p220 = scmp.eq.s32.totalorder %s27, 0
        // Predicated region
        $region37: #{tpu_custom_call.1} parent=27 // pred_check
          %p221 = pneg %p220
        $region38: #{tpu_custom_call.1} parent=27 // pred_check_branch
          %223 = sbr.rel (%p221) target = $region40
        $region39: #{tpu_custom_call.1} parent=27 // pred_region
          %v224 = vlaneseq
          %vm225 = vcmp.ge.s32.totalorder %v224, 0
          %vm226 = vcmp.lt.s32.totalorder %v224, 256
          %vm227 = vmand %vm225, %vm226
          %228 = vst.msk [vmem:[%s217] sm:$0x3] %vm227, 0.0
        $region40: #{tpu_custom_call.1} parent=27 // pred_fallthru
          _
        %v229 = vld [vmem:[%s183] sm:$0xff]
        %v230 = vld [vmem:[%s192] sm:$0xff]
        %v232 = vcombine.high %v230, %v230
        %vm234 = vcmask 1043456
        %v235 = vsel %vm234, %v230, -inf
        %v236 = vrot.slane %v235, 4
        %v237 = vmax.f32 %v235, %v236
        %v238 = vrot.slane %v237, 2
        %v239 = vmax.f32 %v237, %v238
        %v240 = vrot.slane %v239, 1
        %v241 = vmax.f32 %v239, %v240
        %v242 = vsel %vm234, %v232, -inf
        %v243 = vrot.slane %v242, 4
        %v244 = vmax.f32 %v242, %v243
        %v245 = vrot.slane %v244, 2
        %v246 = vmax.f32 %v244, %v245
        %v247 = vrot.slane %v246, 1
        %v248 = vmax.f32 %v246, %v247
        %v251 = vcombine.low %v241, %v248
        %v253 = vsub.f32 %v230, %v251
        %v254 = vmul.f32 %v253, 1.442695
        %v255 = vpow.pop %v254
        %v257 = vcombine.high %v255, %v255
        %v259 = vsel %vm234, %v255, 0.0
        %v260 = vrot.slane %v259, 4
        %v261 = vadd.f32 %v259, %v260
        %v262 = vrot.slane %v261, 2
        %v263 = vadd.f32 %v261, %v262
        %v264 = vrot.slane %v263, 1
        %v265 = vadd.f32 %v263, %v264
        %v266 = vsel %vm234, %v257, 0.0
        %v267 = vrot.slane %v266, 4
        %v268 = vadd.f32 %v266, %v267
        %v269 = vrot.slane %v268, 2
        %v270 = vadd.f32 %v268, %v269
        %v271 = vrot.slane %v270, 1
        %v272 = vadd.f32 %v270, %v271
        %v274 = vcombine.high %v229, %v229
        %v276 = vsel %vm234, %v229, -inf
        %v277 = vrot.slane %v276, 4
        %v278 = vmax.f32 %v276, %v277
        %v279 = vrot.slane %v278, 2
        %v280 = vmax.f32 %v278, %v279
        %v281 = vrot.slane %v280, 1
        %v282 = vmax.f32 %v280, %v281
        %v283 = vsel %vm234, %v274, -inf
        %v284 = vrot.slane %v283, 4
        %v285 = vmax.f32 %v283, %v284
        %v286 = vrot.slane %v285, 2
        %v287 = vmax.f32 %v285, %v286
        %v288 = vrot.slane %v287, 1
        %v289 = vmax.f32 %v287, %v288
        %v292 = vcombine.low %v282, %v289
        %v294 = vsub.f32 %v229, %v292
        %v295 = vmul.f32 %v294, 1.442695
        %v296 = vpow.pop %v295
        %v298 = vcombine.high %v296, %v296
        %v300 = vsel %vm234, %v296, 0.0
        %v301 = vrot.slane %v300, 4
        %v302 = vadd.f32 %v300, %v301
        %v303 = vrot.slane %v302, 2
        %v304 = vadd.f32 %v302, %v303
        %v305 = vrot.slane %v304, 1
        %v306 = vadd.f32 %v304, %v305
        %v307 = vsel %vm234, %v298, 0.0
        %v308 = vrot.slane %v307, 4
        %v309 = vadd.f32 %v307, %v308
        %v310 = vrot.slane %v309, 2
        %v311 = vadd.f32 %v309, %v310
        %v312 = vrot.slane %v311, 1
        %v313 = vadd.f32 %v311, %v312
        %v314 = vlog2.pop %v306
        %v315 = vmul.f32 %v314, 0.6931472
        %v316 = vlog2.pop %v313
        %v317 = vmul.f32 %v316, 0.6931472
        %v318 = vmul.f32 %v255, %v294
        %v320 = vcombine.high %v318, %v318
        %v322 = vsel %vm234, %v318, 0.0
        %v323 = vrot.slane %v322, 4
        %v324 = vadd.f32 %v322, %v323
        %v325 = vrot.slane %v324, 2
        %v326 = vadd.f32 %v324, %v325
        %v327 = vrot.slane %v326, 1
        %v328 = vadd.f32 %v326, %v327
        %v329 = vsel %vm234, %v320, 0.0
        %v330 = vrot.slane %v329, 4
        %v331 = vadd.f32 %v329, %v330
        %v332 = vrot.slane %v331, 2
        %v333 = vadd.f32 %v331, %v332
        %v334 = vrot.slane %v333, 1
        %v335 = vadd.f32 %v333, %v334
        %v336 = vrcp.pop %v265
        %v337 = vrcp.pop %v272
        %v338 = vmul.f32 %v328, %v336
        %v339 = vmul.f32 %v335, %v337
        %v340 = vsub.f32 %v315, %v338
        %v341 = vsub.f32 %v317, %v339
        %v342 = vld [vmem:[%s217] sm:$0x3]
        %v345 = vcombine.low %v340, %v341
        %v347 = vunpack.c.l.s4 1966171168
        %v348 = vunpack.c.0.s8 %v347
        %v349 = vlaneseq
        %v350 = vshrl.u32 %v349, 7
        %v351 = vsub.s32 %v348, %v350
        %v352 = vrot.slane %v345, %v351
        %v354 = vunpack.c.l.s4 1966171168
        %v355 = vunpack.c.0.s8 %v354
        %v356 = vlaneseq
        %v357 = vshrl.u32 %v356, 7
        %v358 = vsub.s32 %v355, %v357
        %v359 = vrot.slane %v352, %v358
        %v361 = vadd.f32 %v342, %v359
        %v362 = vlaneseq
        %vm363 = vcmp.ge.s32.totalorder %v362, 0
        %vm364 = vcmp.lt.s32.totalorder %v362, 256
        %vm365 = vmand %vm363, %vm364
        %366 = vst.msk [vmem:[%s217] sm:$0x3] %vm365, %v361
        %s367 = sand.u32 %s98, 1
        %s368 = scalar_lea.sflag [#allocation4], %s367
        %s369 = sand.u32 %s98, 1
        %s370 = smul.addr %s369, 2
        %s371 = scalar_lea.vmem [#allocation7], %s370
        // Predicated region
        $region41: #{tpu_custom_call.1} parent=27 // pred_check
          %p372 = pneg %p108
        $region42: #{tpu_custom_call.1} parent=27 // pred_check_branch
          %374 = sbr.rel (%p372) target = $region44
        $region43: #{tpu_custom_call.1} parent=27 // pred_region
          %s376 = ssub.s32 32, 32
          %377 = vsyncadd %s368, %s376
          %s378 = smul.addr %s26, 2
          %s379 = smul.addr %s378, 16
          %s380 = scalar_lea.hbm %s2, %s379
          %s382 = sshll.u32 %s371, 4
          %s383 = int_to_ptr.vmem [resolvable:$true] %s382
          %385 = dma.vmem_to_hbm [thread:$0]  %s383, 32, %s380, %s368
        $region44: #{tpu_custom_call.1} parent=27 // pred_fallthru
          _
      $region28: #{tpu_custom_call.1} parent=5 // pred_fallthru
        _
      %p386 = scmp.le.s32.totalorder 2, %s17
      // Predicated region
      $region45: #{tpu_custom_call.1} parent=5 // pred_check
        %p387 = pneg %p386
      $region46: #{tpu_custom_call.1} parent=5 // pred_check_branch
        %389 = sbr.rel (%p387) target = $region48
      $region47: #{tpu_custom_call.1} parent=5 // pred_region
        %s390 = ssub.s32 %s17, 2
        // Predicated region
        $region49: #{tpu_custom_call.1} parent=47 // pred_check
          %p391 = pneg %p114
        $region50: #{tpu_custom_call.1} parent=47 // pred_check_branch
          %393 = sbr.rel (%p391) target = $region52
        $region51: #{tpu_custom_call.1} parent=47 // pred_region
          %s394 = sand.u32 %s99, 1
          %s395 = scalar_lea.sflag [#allocation4], %s394
          %s396 = sand.u32 %s99, 1
          %s397 = smul.addr %s396, 2
          %s398 = scalar_lea.vmem [#allocation7], %s397
          %399 = dma.done %s395, 32
        $region52: #{tpu_custom_call.1} parent=47 // pred_fallthru
          _
      $region48: #{tpu_custom_call.1} parent=5 // pred_fallthru
        _
    $region6: #{tpu_custom_call.1} parent=1 // loop_footer
      %s21 = sadd.s32 1, %s17
    $region7: #{tpu_custom_call.1} parent=1 // loop_footer_branch
      %16 = sbr.rel target = $region3
    $region8: #{tpu_custom_call.1} parent=1 // loop_exit
      _
    %400 = vsyncpa [#allocation3], 1
    %s401 = scalar_lea.sflag [#allocation3], 1
    %402 = vsyncpa %s401, 1
    %403 = vsyncpa [#allocation6], 1
    %s404 = scalar_lea.sflag [#allocation6], 1
    %405 = vsyncpa %s404, 1
    %406 = vsyncpa [#allocation4], 1
    %s407 = scalar_lea.sflag [#allocation4], 1
    %408 = vsyncpa %s407, 1

</llo_original>
